<compile_context>
chip_gen: v5e
topology: v5e:2x2
jax: 0.10.0
libtpu: 0.0.40
codegen_flags: <defaults>
</compile_context>

<pallas_src>
import functools

import jax
import jax.numpy as jnp
import numpy as np
from jax.experimental import pallas as pl
from jax.experimental.pallas import tpu as pltpu

_TARGET_BLOCK_F32_BYTES = 2 * 1024 * 1024   # per in/out block compute budget
_MAX_MIN_BLOCK_F32_BYTES = 4 * 1024 * 1024  # above this (8-row block) -> fallback


# ---------------------------------------------------------------------------
# Kernel
# ---------------------------------------------------------------------------

def _smooth_kernel(coef_ref, x_ref, o_ref, *, h, w,
                   s_prev, s_next, s_up, s_down):
    """One block of (TILE, L): TILE independent flattened image groups.

    coef_ref rows: [cL, cR, cCh, cU, cD, cCv, 0, 0], each (L,) f32.
    Replication-pad fallbacks are already folded into cCh / cCv, so the body is
    4 lane rotations + 6 multiplies + 4 adds per output element.
    """
    x = x_ref[...].astype(jnp.float32)           # (T, L) f32 compute (safe on v5e)
    c = coef_ref[...]                            # (8, L) f32

    # Horizontal [1,2,1]/4 pass (replication at left/right edges via coefficients).
    if w > 1:
        hp = (pltpu.roll(x, s_prev, axis=1) * c[0:1, :]
              + pltpu.roll(x, s_next, axis=1) * c[1:2, :]
              + x * c[2:3, :])
    else:
        hp = x

    # Vertical [1,2,1]/4 pass (replication at top/bottom edges via coefficients).
    if h > 1:
        out = (pltpu.roll(hp, s_up, axis=1) * c[3:4, :]
               + pltpu.roll(hp, s_down, axis=1) * c[4:5, :]
               + hp * c[5:6, :])
    else:
        out = hp

    o_ref[...] = out.astype(o_ref.dtype)


# ---------------------------------------------------------------------------
# Host-side helpers
# ---------------------------------------------------------------------------

@functools.lru_cache(maxsize=None)
def _roll_matches_jnp() -> bool:
    """Probe pltpu.roll's rotate direction once (cached, eager, tiny).

    True  -> pltpu.roll(x, s, axis) == jnp.roll(x, s, axis), i.e.
             out[j] = x[(j - s) % n].
    """
    def kern(x_ref, o_ref):
        o_ref[...] = pltpu.roll(x_ref[...], 1, axis=1)

    x = jnp.tile(jnp.arange(128, dtype=jnp.float32)[None, :], (8, 1))
    out = pl.pallas_call(
        kern, out_shape=jax.ShapeDtypeStruct((8, 128), jnp.float32))(x)
    return bool(np.asarray(jax.device_get(out))[0, 0] == 127.0)


@functools.lru_cache(maxsize=None)
def _num_tensorcores() -> int:
    """Best-effort TensorCore count of one Pallas device (perf-only heuristic)."""
    try:
        kind = jax.devices()[0].device_kind.lower()
    except Exception:
        return 1
    return 2 if any(t in kind for t in ("v4", "v5p", "v7", "7x")) else 1


@functools.lru_cache(maxsize=None)
def _vmem_limit_bytes() -> int:
    """Explicit scoped-VMEM budget: half of physical, capped at 64 MiB."""
    try:
        cap = int(getattr(pltpu.get_tpu_info(), "vmem_capacity_bytes",
                          64 * 1024 * 1024))
    except Exception:
        cap = 64 * 1024 * 1024
    return max(16 * 1024 * 1024, min(64 * 1024 * 1024, cap // 2))


def _pick_group(bc: int, hw: int) -> int:
    """Image slices folded per lane row so the lane axis stays a multiple of 128."""
    if hw % 128 == 0:
        return 1
    for g in range(2, 65):
        if bc % g == 0 and (g * hw) % 128 == 0:
            return g
    return 1


def _pick_tile_rows(rows: int, lane: int) -> int:
    """Rows per block: amortize per-step overhead, stay VMEM-safe, feed all TCs."""
    t = max(8, _TARGET_BLOCK_F32_BYTES // max(lane * 4, 1))
    if _num_tensorcores() >= 2 and rows >= 4 * 8:
        # Multi-TC parts: keep >= 4 grid steps (>= 2 per core) so each core still
        # double-buffers.  Single-TC v5e/v6e: no shrink (bigger blocks win).
        t = min(t, max(8, (rows // 4) // 8 * 8))
    if t >= rows:
        return rows                               # full-dim block is always legal
    return max(8, (t // 8) * 8)                   # sublane-aligned partial block


def _blur_coefficients(h: int, w: int, g: int) -> np.ndarray:
    """Per-lane f32 blur coefficients, (8, g*h*w), replication-pad folded in."""
    hw = h * w
    col = np.arange(hw, dtype=np.int64) % w
    row = np.arange(hw, dtype=np.int64) // w
    c_left = np.where(col > 0, 0.25, 0.0)
    c_right = np.where(col < w - 1, 0.25, 0.0)
    c_cen_h = 1.0 - c_left - c_right              # 0.5 + folded edge replication
    c_up = np.where(row > 0, 0.25, 0.0)
    c_down = np.where(row < h - 1, 0.25, 0.0)
    c_cen_v = 1.0 - c_up - c_down
    zeros = np.zeros(hw)
    coef = np.stack([c_left, c_right, c_cen_h, c_up, c_down, c_cen_v, zeros, zeros])
    return np.tile(coef, (1, g)).astype(np.float32)


# ---------------------------------------------------------------------------
# Public wrapper
# ---------------------------------------------------------------------------

def smooth(x: jax.Array, *, tile_rows: int | None = None) -> jax.Array:
    """Pallas equivalent of Smooth.forward for NCHW input."""
    b, c, h, w = x.shape
    bc, hw = b * c, h * w

    g = _pick_group(bc, hw)
    L = g * hw
    rows = bc // g

    if 8 * L * 4 > _MAX_MIN_BLOCK_F32_BYTES:
        # TODO(synk): halo-tile the flattened hw axis for very large images.
        return smooth_reference(x)

    x2 = x.reshape(rows, L)                       # free: contiguous reinterpretation

    if tile_rows is None:
        tile_rows = _pick_tile_rows(rows, L)
    tile_rows = min(tile_rows, rows)
    grid = (pl.cdiv(rows, tile_rows),)

    if _roll_matches_jnp():
        s_prev, s_next = 1 % L, (L - 1) % L       # prev / next pixel on the lane axis
        s_up, s_down = w % L, (L - w) % L         # pixel one image-row up / down
    else:                                         # opposite rotate convention
        s_prev, s_next = (L - 1) % L, 1 % L
        s_up, s_down = (L - w) % L, w % L

    coef = jnp.asarray(_blur_coefficients(h, w, g))

    out = pl.pallas_call(
        functools.partial(_smooth_kernel, h=h, w=w,
                          s_prev=s_prev, s_next=s_next,
                          s_up=s_up, s_down=s_down),
        out_shape=jax.ShapeDtypeStruct((rows, L), x.dtype),
        grid=grid,
        in_specs=[
            pl.BlockSpec((8, L), lambda i: (0, 0)),          # constant coefficients
            pl.BlockSpec((tile_rows, L), lambda i: (i, 0)),  # input slices
        ],
        out_specs=pl.BlockSpec((tile_rows, L), lambda i: (i, 0)),
        compiler_params=pltpu.CompilerParams(
            dimension_semantics=("parallel",),
            vmem_limit_bytes=_vmem_limit_bytes(),
        ),
    )(coef, x2)
    return out.reshape(b, c, h, w)


def smooth_reference(x: jax.Array) -> jax.Array:
    """Pure-JAX reference: ReplicationPad2d(1) + conv2d with the fixed blur kernel."""
    k = np.array([[1.0, 2.0, 1.0], [2.0, 4.0, 2.0], [1.0, 2.0, 1.0]], dtype=np.float32)
    k /= k.sum()
    b, c, h, w = x.shape
    xv = x.reshape(b * c, 1, h, w).astype(jnp.float32)
    xp = jnp.pad(xv, ((0, 0), (0, 0), (1, 1), (1, 1)), mode="edge")
    y = jax.lax.conv_general_dilated(
        xp, jnp.asarray(k)[None, None, :, :], window_strides=(1, 1), padding="VALID")
    return y.reshape(b, c, h, w).astype(x.dtype)


if __name__ == "__main__":
    key = jax.random.PRNGKey(0)
    k1, k2, k3, k4 = jax.random.split(key, 4)

    _roll_matches_jnp()                       # warm the cached direction probe
    smooth_fn = jax.jit(smooth)

    # 1) Primary shape (typical small test case).
    x = jax.random.normal(k1, (2, 4, 16, 16), dtype=jnp.float32)
    out = jax.block_until_ready(smooth_fn(x))
    assert out.shape == x.shape
    np.testing.assert_allclose(np.asarray(out), np.asarray(smooth_reference(x)),
                               rtol=1e-5, atol=1e-5)

    # 2) w != h, lane-dense (h*w == 128).
    x2 = jax.random.normal(k2, (2, 16, 16, 8), dtype=jnp.float32)
    out2 = jax.block_until_ready(smooth_fn(x2))
    np.testing.assert_allclose(np.asarray(out2), np.asarray(smooth_reference(x2)),
                               rtol=1e-5, atol=1e-5)

    # 3) Small image (h*w = 96): exercises channel folding (g=4) and a >1-step grid.
    x3 = jax.random.normal(k3, (4, 32, 8, 12), dtype=jnp.float32)
    out3 = jax.block_until_ready(jax.jit(functools.partial(smooth, tile_rows=8))(x3))
    np.testing.assert_allclose(np.asarray(out3), np.asarray(smooth_reference(x3)),
                               rtol=1e-5, atol=1e-5)

    # 4) Partial final block (rows not a multiple of tile_rows) + bf16 storage.
    x4 = jax.random.normal(k4, (2, 5, 16, 16), dtype=jnp.bfloat16)
    out4 = jax.block_until_ready(jax.jit(functools.partial(smooth, tile_rows=8))(x4))
    np.testing.assert_allclose(np.asarray(out4, dtype=np.float32),
                               np.asarray(smooth_reference(x4), dtype=np.float32),
                               rtol=2e-2, atol=2e-2)

    print("KERNEL_OK")
</pallas_src>

<mosaic_0001>
module attributes {stable_mosaic.version = 11 : i64} {
  func.func @kern(%arg0: memref<8x128xf32, #tpu.memory_space<vmem>>, %arg1: memref<8x128xf32, #tpu.memory_space<vmem>>) attributes {dimension_semantics = [], scalar_prefetch = 0 : i64, scratch_operands = 0 : i64, tpu.core_type = #tpu.core_type<tc>} {
    %c0 = arith.constant 0 : index
    %c0_0 = arith.constant 0 : index
    %0 = vector.load %arg0[%c0, %c0_0] : memref<8x128xf32, #tpu.memory_space<vmem>>, vector<8x128xf32>
    %c1_i32 = arith.constant 1 : i32
    %1 = tpu.dynamic_rotate %0 by %c1_i32 dim 1 : vector<8x128xf32>, i32 -> vector<8x128xf32>
    %c0_1 = arith.constant 0 : index
    %c0_2 = arith.constant 0 : index
    %2 = vector.load %arg1[%c0_1, %c0_2] : memref<8x128xf32, #tpu.memory_space<vmem>>, vector<8x128xf32>
    tpu.vector_store %arg1[%c0_1, %c0_2], %1 {strides = array<i32>} : memref<8x128xf32, #tpu.memory_space<vmem>>, vector<8x128xf32>,
    return
  }
}

</mosaic_0001>

<llo_original>
// kernel: tpu_custom_call.1
$region0: #{tpu_custom_call.1}
  #allocation0 [shape = 'u32[]', space=smem, size = 0x4, offset = 0x4, fixed_abs, tag = 'smem constant byte address 0x4 - core index']
  #allocation1 [shape = 'u32[72,128]{1,0:T(1,128)}', space=vmem, size = 0x9000, scoped, tag = 'internal scratch']
  %s0 = inlined_call_operand.hbm [shape: f32[8,128], index: 0, kind: input, shape index: {}]
  %s1 = inlined_call_operand.hbm [shape: f32[8,128], index: 1, kind: output, shape index: {}]
  %s2 = sld [smem:[#allocation0]]
  $region18: #{tpu_custom_call.1} parent=0
    _
  %s4 = ssub.s32 1, %s2
  %s5 = scalar_select 0, %s4, %s2
  $region1: #{tpu_custom_call.1} parent=0
    #allocation2 [shape = 'u8[4096]{0}', space=vmem, size = 0x1000, scoped, tag = 'input window, operand 0, single buffered']
    #allocation3 [shape = 's32[1]{0}', space=sflag, size = 0x4, scoped, tag = 'scoped memory for tpu_custom_call.1']
    #allocation4 [shape = 's32[1]{0}', space=sflag, size = 0x4, scoped, tag = 'scoped memory for tpu_custom_call.1']
    #allocation5 [shape = 'u8[4096]{0}', space=vmem, size = 0x1000, scoped, tag = 'output window, operand 0, single buffered']
    %6 = vsyncpa [#allocation3], 0
    %7 = vsyncpa [#allocation4], 0
    // Predicated region
    $region2: #{tpu_custom_call.1} parent=1 // pred_check
      _
    $region3: #{tpu_custom_call.1} parent=1 // pred_check_branch
      %9 = sbr.rel (0) target = $region5
    $region4: #{tpu_custom_call.1} parent=1 // pred_region
      %11 = vsyncadd [#allocation3], 0
      %s13 = sshll.u32 %s0, 4
      %s14 = int_to_ptr.hbm [resolvable:$true] %s13
      %s15 = sshll.u32 [#allocation2], 4
      %s16 = int_to_ptr.vmem [resolvable:$true] %s15
      %18 = dma.hbm_to_vmem [thread:$0]  %s14, 128, %s16, [#allocation3]
    $region5: #{tpu_custom_call.1} parent=1 // pred_fallthru
      _
    // Predicated region
    $region6: #{tpu_custom_call.1} parent=1 // pred_check
      _
    $region7: #{tpu_custom_call.1} parent=1 // pred_check_branch
      %20 = sbr.rel (0) target = $region9
    $region8: #{tpu_custom_call.1} parent=1 // pred_region
      %22 = dma.done [#allocation3], 128
    $region9: #{tpu_custom_call.1} parent=1 // pred_fallthru
      _
    %v23 = vld [vmem:[#allocation2] sm:$0xff]
    %24 = vrot.lane.b32.xlu0 %v23, 1
    %v25 = vpop.permute.xlu0 %24
    %26 = vst [vmem:[#allocation5] sm:$0xff] %v25
    // Predicated region
    $region10: #{tpu_custom_call.1} parent=1 // pred_check
      _
    $region11: #{tpu_custom_call.1} parent=1 // pred_check_branch
      %28 = sbr.rel (0) target = $region13
    $region12: #{tpu_custom_call.1} parent=1 // pred_region
      %30 = vsyncadd [#allocation4], 0
      %s32 = sshll.u32 [#allocation5], 4
      %s33 = int_to_ptr.vmem [resolvable:$true] %s32
      %s34 = sshll.u32 %s1, 4
      %s35 = int_to_ptr.hbm [resolvable:$true] %s34
      %37 = dma.vmem_to_hbm [thread:$0]  %s33, 128, %s35, [#allocation4]
    $region13: #{tpu_custom_call.1} parent=1 // pred_fallthru
      _
    // Predicated region
    $region14: #{tpu_custom_call.1} parent=1 // pred_check
      _
    $region15: #{tpu_custom_call.1} parent=1 // pred_check_branch
      %39 = sbr.rel (0) target = $region17
    $region16: #{tpu_custom_call.1} parent=1 // pred_region
      %41 = dma.done [#allocation4], 128
    $region17: #{tpu_custom_call.1} parent=1 // pred_fallthru
      _
    %42 = vsyncpa [#allocation3], 1
    %43 = vsyncpa [#allocation4], 1

</llo_original>
